<compile_context>
chip_gen: v6e
topology: v6e:2x2x1
jax: 0.10.0
libtpu: 0.0.40
codegen_flags: <defaults>
</compile_context>

<pallas_src>
import math
import jax
import jax.numpy as jnp
from jax import lax
from jax.experimental import pallas as pl
from jax.experimental.pallas import tpu as pltpu


# --------------------------------------------------------------------------
# Kernel: one (batch, row-tile) per grid step.
#   x_ref : (H+2, W*Cin)        H-padded input rows for this batch (revisited)
#   m_ref : (3, W*Cin, W*Cconv) banded weights (one band per kh tap)
#   b_ref : (1, W*Cconv)        per-column bias (gamma/beta already folded)
#   o_ref : (TH, W*Cconv)       lane-dense output rows for this H-tile
# --------------------------------------------------------------------------
def _conv_rows_kernel(x_ref, m_ref, b_ref, o_ref):
    th = o_ref.shape[0]
    i = pl.program_id(1)
    r0 = i * th
    if th % 8 == 0:
        r0 = pl.multiple_of(r0, 8)

    acc = jnp.zeros(o_ref.shape, jnp.float32)
    for kh in range(3):                      # static unroll -> 3 MXU matmuls
        lhs = x_ref[pl.ds(r0 + kh, th), :]   # (TH, W*Cin)
        acc = acc + jnp.dot(lhs, m_ref[kh],
                            preferred_element_type=jnp.float32)

    o_ref[...] = (acc + b_ref[...]).astype(o_ref.dtype)


def _build_banded_weight(w_hwio, width):
    """Expand (3,3,Cin,Cconv) weights into a per-kh banded matrix.

    m[kh, wi*Cin + ci, wo*Cconv + ch] = w_hwio[kh, wi-wo+1, ci, ch]
    for wi-wo+1 in {0,1,2} and 0 <= wi < width  (W boundary handled here).
    """
    kh, kw, cin, cconv = w_hwio.shape
    m = jnp.zeros((kh, width * cin, width * cconv), w_hwio.dtype)
    for wo in range(width):
        lo = max(0, wo - 1)
        hi = min(width, wo + 2)
        kw_lo = lo - wo + 1
        blk = w_hwio[:, kw_lo:kw_lo + (hi - lo)].reshape(kh, (hi - lo) * cin, cconv)
        m = m.at[:, lo * cin:hi * cin, wo * cconv:(wo + 1) * cconv].set(blk)
    return m


def _pick_row_tile(h):
    """Largest H-tile (multiple of 8) that still gives >= 2 tiles; else H."""
    for t in (128, 64, 32, 16, 8):
        if h % t == 0 and h // t >= 2:
            return t
    return h


def upsample_forward(x, params):
    """Upsample.forward (subpixel=True): NormConv2d(Cin, 4*Cout, 3, pad=1) + DepthToSpace(2).

    x : (N, Cin, H, W) float32 (NCHW, like PyTorch); returns (N, Cout, 2H, 2W).
    """
    N, Cin, H, W = x.shape
    v, g, bias = params["v"], params["g"], params["bias"]
    gamma, beta = params["gamma"], params["beta"]
    Cconv = v.shape[0]                       # = 4 * out_channels
    Co = Cconv // 4

    # --- host-side parameter prep (parameter-sized, negligible) -------------
    # weight_norm: w = g * v / ||v||, then fold NormConv2d gamma/beta:
    #   gamma*(conv(x, w) + bias) + beta == conv(x, gamma*w) + (gamma*bias + beta)
    v_norm = jnp.sqrt(jnp.sum(v * v, axis=(1, 2, 3), keepdims=True))
    w = (g.reshape(Cconv, 1, 1, 1) / v_norm) * v          # (Cconv, Cin, 3, 3)
    w = gamma.reshape(Cconv, 1, 1, 1) * w
    b_eff = gamma * bias + beta                            # (Cconv,)
    w_hwio = jnp.transpose(w, (2, 3, 1, 0))                # (3, 3, Cin, Cconv)

    m = _build_banded_weight(w_hwio, W)                    # (3, W*Cin, W*Cconv)
    b_row = jnp.tile(b_eff, W).reshape(1, W * Cconv)       # (1, W*Cconv)

    # --- input layout: NCHW -> (N, H, W*Cin), pad H only ---------------------
    x_rows = jnp.transpose(x, (0, 2, 3, 1)).reshape(N, H, W * Cin)
    x_rows = jnp.pad(x_rows, ((0, 0), (1, 1), (0, 0)))     # (N, H+2, W*Cin)

    th = _pick_row_tile(H)
    grid = (N, H // th)

    conv = pl.pallas_call(
        _conv_rows_kernel,
        out_shape=jax.ShapeDtypeStruct((N, H, W * Cconv), jnp.float32),
        grid_spec=pltpu.PrefetchScalarGridSpec(
            num_scalar_prefetch=0,
            grid=grid,
            in_specs=[
                # full padded image per batch, revisited across H-tiles (no re-DMA)
                pl.BlockSpec((None, H + 2, W * Cin), lambda n, i: (n, 0, 0)),
                pl.BlockSpec((3, W * Cin, W * Cconv), lambda n, i: (0, 0, 0)),
                pl.BlockSpec((1, W * Cconv), lambda n, i: (0, 0)),
            ],
            out_specs=pl.BlockSpec((None, th, W * Cconv), lambda n, i: (n, i, 0)),
        ),
        compiler_params=pltpu.CompilerParams(
            dimension_semantics=("parallel", "parallel")),
    )(x_rows, m, b_row)

    # --- fused DepthToSpace(2) + back to NCHW: one transpose pass ------------
    # conv[n, h, wo*Cconv + (b1*2*Co + b2*Co + co)] -> out[n, co, 2h+b1, 2wo+b2]
    y = conv.reshape(N, H, W, 2, 2, Co)
    y = jnp.transpose(y, (0, 5, 1, 3, 2, 4))
    return y.reshape(N, Co, 2 * H, 2 * W)


# --------------------------------------------------------------------------
# Parameter init mirroring the PyTorch module shapes, and a pure-XLA reference.
# --------------------------------------------------------------------------
def init_params(key, in_channels, out_channels):
    cout = 4 * out_channels                                # subpixel branch
    k_v, k_b = jax.random.split(key)
    fan_in = in_channels * 3 * 3
    bound = 1.0 / math.sqrt(fan_in)
    v = jax.random.uniform(k_v, (cout, in_channels, 3, 3), jnp.float32,
                           -math.sqrt(3.0) * bound, math.sqrt(3.0) * bound)
    g = jnp.sqrt(jnp.sum(v * v, axis=(1, 2, 3)))           # weight_norm init
    bias = jax.random.uniform(k_b, (cout,), jnp.float32, -bound, bound)
    gamma = jnp.ones((cout,), jnp.float32)
    beta = jnp.zeros((cout,), jnp.float32)
    return {"v": v, "g": g, "bias": bias, "gamma": gamma, "beta": beta}


def _depth_to_space_ref(x, bs):
    n, c, h, w = x.shape
    x = x.reshape(n, bs, bs, c // bs ** 2, h, w)
    x = jnp.transpose(x, (0, 3, 4, 1, 5, 2))
    return x.reshape(n, c // bs ** 2, h * bs, w * bs)


def _reference_forward(x, p):
    cout = p["v"].shape[0]
    v_norm = jnp.sqrt(jnp.sum(p["v"] ** 2, axis=(1, 2, 3), keepdims=True))
    w = (p["g"].reshape(cout, 1, 1, 1) / v_norm) * p["v"]
    conv = lax.conv_general_dilated(
        x, w, window_strides=(1, 1), padding=((1, 1), (1, 1)),
        dimension_numbers=("NCHW", "OIHW", "NCHW"))
    conv = conv + p["bias"].reshape(1, cout, 1, 1)
    conv = p["gamma"].reshape(1, cout, 1, 1) * conv + p["beta"].reshape(1, cout, 1, 1)
    return _depth_to_space_ref(conv, 2)


if __name__ == "__main__":
    key = jax.random.PRNGKey(0)
    k_x, k_p = jax.random.split(key)

    N, C_IN, C_OUT, H, W = 2, 4, 4, 16, 16
    x = jax.random.normal(k_x, (N, C_IN, H, W), jnp.float32)
    params = init_params(k_p, C_IN, C_OUT)

    out = jax.block_until_ready(upsample_forward(x, params))
    assert out.shape == (N, C_OUT, 2 * H, 2 * W), out.shape

    ref = jax.block_until_ready(_reference_forward(x, params))
    assert jnp.allclose(out, ref, atol=1e-4, rtol=1e-4), \
        float(jnp.max(jnp.abs(out - ref)))

    print("KERNEL_OK")
</pallas_src>

<mosaic_0001>
module attributes {stable_mosaic.version = 11 : i64} {
  func.func @_conv_rows_kernel(%arg0: i32, %arg1: i32, %arg2: memref<1x18x64xf32, #tpu.memory_space<vmem>>, %arg3: memref<3x64x256xf32, #tpu.memory_space<vmem>>, %arg4: memref<1x256xf32, #tpu.memory_space<vmem>>, %arg5: memref<1x8x256xf32, #tpu.memory_space<vmem>>) attributes {dimension_semantics = [#tpu.dimension_semantics<parallel>, #tpu.dimension_semantics<parallel>], iteration_bounds = array<i64: 2, 2>, scalar_prefetch = 0 : i64, scratch_operands = 0 : i64, tpu.core_type = #tpu.core_type<tc>, window_params = [{transform_indices = @transform_0, window_bounds = array<i64: 1, 18, 64>}, {pipeline_mode = #tpu.pipeline_mode<synchronous>, transform_indices = @transform_1, window_bounds = array<i64: 3, 64, 256>}, {pipeline_mode = #tpu.pipeline_mode<synchronous>, transform_indices = @transform_2, window_bounds = array<i64: 1, 256>}, {transform_indices = @transform_3, window_bounds = array<i64: 1, 8, 256>}]} {
    %c8_i32 = arith.constant 8 : i32
    %0 = arith.muli %arg1, %c8_i32 : i32
    %1 = tpu.assume_multiple %0, 8 : i32
    %cst = arith.constant 0.000000e+00 : f32
    %2 = vector.broadcast %cst : f32 to vector<8x256xf32>
    %c0_i32 = arith.constant 0 : i32
    %3 = arith.addi %1, %c0_i32 : i32
    %c0 = arith.constant 0 : index
    %4 = arith.index_cast %3 : i32 to index
    %c0_0 = arith.constant 0 : index
    %5 = vector.load %arg2[%c0, %4, %c0_0] : memref<1x18x64xf32, #tpu.memory_space<vmem>>, vector<1x8x64xf32>
    %6 = vector.shape_cast %5 : vector<1x8x64xf32> to vector<8x64xf32>
    %c0_1 = arith.constant 0 : index
    %c0_2 = arith.constant 0 : index
    %c0_3 = arith.constant 0 : index
    %7 = vector.load %arg3[%c0_1, %c0_2, %c0_3] : memref<3x64x256xf32, #tpu.memory_space<vmem>>, vector<1x64x256xf32>
    %8 = vector.shape_cast %7 : vector<1x64x256xf32> to vector<64x256xf32>
    %cst_4 = arith.constant dense<0.000000e+00> : vector<8x256xf32>
    %9 = tpu.matmul %6, %8, %cst_4 {dimension_numbers = #tpu.dot_dimension_numbers<[1], [0], [0], [1], [0, 0, 1, 1], [], []>} : vector<8x64xf32>, vector<64x256xf32>, vector<8x256xf32> -> vector<8x256xf32>
    %10 = arith.addf %2, %9 : vector<8x256xf32>
    %c1_i32 = arith.constant 1 : i32
    %11 = arith.addi %1, %c1_i32 : i32
    %c0_5 = arith.constant 0 : index
    %12 = arith.index_cast %11 : i32 to index
    %c0_6 = arith.constant 0 : index
    %13 = vector.load %arg2[%c0_5, %12, %c0_6] : memref<1x18x64xf32, #tpu.memory_space<vmem>>, vector<1x8x64xf32>
    %14 = vector.shape_cast %13 : vector<1x8x64xf32> to vector<8x64xf32>
    %c1 = arith.constant 1 : index
    %c0_7 = arith.constant 0 : index
    %c0_8 = arith.constant 0 : index
    %15 = vector.load %arg3[%c1, %c0_7, %c0_8] : memref<3x64x256xf32, #tpu.memory_space<vmem>>, vector<1x64x256xf32>
    %16 = vector.shape_cast %15 : vector<1x64x256xf32> to vector<64x256xf32>
    %cst_9 = arith.constant dense<0.000000e+00> : vector<8x256xf32>
    %17 = tpu.matmul %14, %16, %cst_9 {dimension_numbers = #tpu.dot_dimension_numbers<[1], [0], [0], [1], [0, 0, 1, 1], [], []>} : vector<8x64xf32>, vector<64x256xf32>, vector<8x256xf32> -> vector<8x256xf32>
    %18 = arith.addf %10, %17 : vector<8x256xf32>
    %c2_i32 = arith.constant 2 : i32
    %19 = arith.addi %1, %c2_i32 : i32
    %c0_10 = arith.constant 0 : index
    %20 = arith.index_cast %19 : i32 to index
    %c0_11 = arith.constant 0 : index
    %21 = vector.load %arg2[%c0_10, %20, %c0_11] : memref<1x18x64xf32, #tpu.memory_space<vmem>>, vector<1x8x64xf32>
    %22 = vector.shape_cast %21 : vector<1x8x64xf32> to vector<8x64xf32>
    %c2 = arith.constant 2 : index
    %c0_12 = arith.constant 0 : index
    %c0_13 = arith.constant 0 : index
    %23 = vector.load %arg3[%c2, %c0_12, %c0_13] : memref<3x64x256xf32, #tpu.memory_space<vmem>>, vector<1x64x256xf32>
    %24 = vector.shape_cast %23 : vector<1x64x256xf32> to vector<64x256xf32>
    %cst_14 = arith.constant dense<0.000000e+00> : vector<8x256xf32>
    %25 = tpu.matmul %22, %24, %cst_14 {dimension_numbers = #tpu.dot_dimension_numbers<[1], [0], [0], [1], [0, 0, 1, 1], [], []>} : vector<8x64xf32>, vector<64x256xf32>, vector<8x256xf32> -> vector<8x256xf32>
    %26 = arith.addf %18, %25 : vector<8x256xf32>
    %c0_15 = arith.constant 0 : index
    %c0_16 = arith.constant 0 : index
    %27 = vector.load %arg4[%c0_15, %c0_16] : memref<1x256xf32, #tpu.memory_space<vmem>>, vector<1x256xf32>
    %28 = vector.broadcast %27 : vector<1x256xf32> to vector<8x256xf32>
    %29 = arith.addf %26, %28 : vector<8x256xf32>
    %c0_17 = arith.constant 0 : index
    %c0_18 = arith.constant 0 : index
    %c0_19 = arith.constant 0 : index
    %30 = vector.load %arg5[%c0_17, %c0_18, %c0_19] : memref<1x8x256xf32, #tpu.memory_space<vmem>>, vector<1x8x256xf32>
    %31 = vector.shape_cast %30 : vector<1x8x256xf32> to vector<8x256xf32>
    %32 = vector.shape_cast %29 : vector<8x256xf32> to vector<1x8x256xf32>
    tpu.vector_store %arg5[%c0_17, %c0_18, %c0_19], %32 {strides = array<i32>} : memref<1x8x256xf32, #tpu.memory_space<vmem>>, vector<1x8x256xf32>,
    return
  }
  func.func @transform_0(%arg0: i32, %arg1: i32) -> (i32, i32, i32) {
    %c0_i32 = arith.constant 0 : i32
    %c0_i32_0 = arith.constant 0 : i32
    %c0_i32_1 = arith.constant 0 : i32
    return %arg0, %c0_i32, %c0_i32_0 : i32, i32, i32
  }
  func.func @transform_1(%arg0: i32, %arg1: i32) -> (i32, i32, i32) {
    %c0_i32 = arith.constant 0 : i32
    %c0_i32_0 = arith.constant 0 : i32
    %c0_i32_1 = arith.constant 0 : i32
    %c0_i32_2 = arith.constant 0 : i32
    return %c0_i32, %c0_i32_0, %c0_i32_1 : i32, i32, i32
  }
  func.func @transform_2(%arg0: i32, %arg1: i32) -> (i32, i32) {
    %c0_i32 = arith.constant 0 : i32
    %c0_i32_0 = arith.constant 0 : i32
    %c0_i32_1 = arith.constant 0 : i32
    return %c0_i32, %c0_i32_0 : i32, i32
  }
  func.func @transform_3(%arg0: i32, %arg1: i32) -> (i32, i32, i32) {
    %c0_i32 = arith.constant 0 : i32
    %c0_i32_0 = arith.constant 0 : i32
    return %arg0, %arg1, %c0_i32 : i32, i32, i32
  }
}

</mosaic_0001>

<llo_original>
// kernel: tpu_custom_call.1
$region0: #{tpu_custom_call.1}
  #allocation0 [shape = 'u32[]', space=smem, size = 0x4, offset = 0x4, fixed_abs, tag = 'smem constant byte address 0x4 - core index']
  #allocation1 [shape = 'u32[144,128]{1,0:T(1,128)}', space=vmem, size = 0x12000, scoped, tag = 'internal scratch']
  %s0 = inlined_call_operand.vmem [shape: f32[2,18,64], index: 0, kind: input, shape index: {}]
  %s1 = inlined_call_operand.hbm [shape: f32[3,64,256], index: 1, kind: input, shape index: {}]
  %s2 = inlined_call_operand.vmem [shape: f32[1,256], index: 2, kind: input, shape index: {}]
  %s3 = inlined_call_operand.hbm [shape: f32[2,16,256], index: 3, kind: output, shape index: {}]
  %s4 = sld [smem:[#allocation0]]
  $region49: #{tpu_custom_call.1} parent=0
    _
  %s6 = ssub.s32 1, %s4
  %s7 = scalar_select 0, %s6, %s4
  $region1: #{tpu_custom_call.1} parent=0
    #allocation2 [shape = 'u8[196608]{0}', space=vmem, size = 0x30000, scoped, tag = 'input window, operand 1, single buffered']
    #allocation3 [shape = 's32[2]{0}', space=sflag, size = 0x8, scoped, tag = 'scoped memory for tpu_custom_call.1']
    #allocation4 [shape = 's32[2]{0}', space=sflag, size = 0x8, scoped, tag = 'scoped memory for tpu_custom_call.1']
    #allocation5 [shape = 'u8[16384]{0}', space=vmem, size = 0x4000, scoped, tag = 'output window, operand 0']
    %8 = vsyncpa [#allocation3], 0
    %9 = vsyncpa [#allocation4], 0
    %s10 = scalar_lea.sflag [#allocation4], 1
    %11 = vsyncpa %s10, 0
    loop: start=0, step=1, limit=6
    $region2: #{tpu_custom_call.1} parent=1 // loop_pre_header
      _
    $region3: #{tpu_custom_call.1} parent=1 // loop_header
      %s13 = sphi 0, %s17
      %p14 = scmp.ge.s32.totalorder %s13, 6
      %s20 = sphi 0, %s32
      %s21 = sphi 0, %s28
      %s22 = sphi 0, %s20
      %s23 = sphi 0, %s21
      %s24 = sphi 0, %s22
      %s25 = sphi 0, %s23
      %s35 = sphi 0, %s37
      %s38 = sphi 0, %s35
      %s39 = sphi 0, %s38
      %s55 = sphi 0, %s39
      %s59 = sphi 0, %s59
      %s61 = sphi 0, %s59
      %s62 = sphi 0, %s61
      %s76 = sphi 0, %s62
      %s80 = sphi 0, %s80
      %s82 = sphi 0, %s80
      %s83 = sphi 0, %s82
      %s97 = sphi 0, %s83
      %s105 = sphi 0, %s107
      %s108 = sphi 0, %s105
      %s109 = sphi 0, %s108
      %s125 = sphi 0, %s109
    $region4: #{tpu_custom_call.1} parent=1 // loop_header_branch
      %16 = sbr.rel (%p14) target = $region8
    $region5: #{tpu_custom_call.1} parent=1 // loop_body
      %s18 = ssub.s32 %s13, 1
      %s19 = ssub.s32 %s13, 2
      %s26 = sadd.s32 1, %s21
      %p27 = scmp.ge.s32.totalorder %s26, 2
      %s28 = scalar_select %p27, 0, %s26
      %s29 = sadd.s32 1, %s20
      %s30 = scalar_select %p27, %s29, %s20
      %p31 = scmp.ge.s32.totalorder %s30, 2
      %s32 = scalar_select %p31, 0, %s30
      %s33 = ssub.s32 %s20, %s32
      %p34 = scmp.eq.s32.totalorder %s33, 0
      %s36 = sadd.s32 %s35, 1
      %s37 = scalar_select %p34, %s35, %s36
      %p40 = pneg %p34
      %p41 = scmp.eq.s32.totalorder %s13, 3
      %p42 = por %p40, %p41
      %p43 = scmp.ne.s32.totalorder %s35, %s38
      %p44 = scmp.eq.s32.totalorder %s13, 0
      %p45 = por %p43, %p44
      %p46 = scmp.ne.s32.totalorder %s35, %s38
      %p47 = scmp.eq.s32.totalorder %s18, 3
      %p48 = por %p46, %p47
      %p49 = scmp.ne.s32.totalorder %s38, %s39
      %p50 = scmp.eq.s32.totalorder %s18, 0
      %p51 = por %p49, %p50
      %p52 = scmp.ne.s32.totalorder %s38, %s39
      %p53 = scmp.eq.s32.totalorder %s19, 3
      %p54 = por %p52, %p53
      %p56 = scmp.ne.s32.totalorder %s39, %s55
      %p57 = scmp.eq.s32.totalorder %s19, 0
      %p58 = por %p56, %p57
      %s60 = sadd.s32 %s59, 1
      %p63 = scmp.eq.s32.totalorder %s13, 3
      %p64 = scmp.ne.s32.totalorder %s59, %s61
      %p65 = scmp.eq.s32.totalorder %s13, 0
      %p66 = por %p64, %p65
      %p67 = scmp.ne.s32.totalorder %s59, %s61
      %p68 = scmp.eq.s32.totalorder %s18, 3
      %p69 = por %p67, %p68
      %p70 = scmp.ne.s32.totalorder %s61, %s62
      %p71 = scmp.eq.s32.totalorder %s18, 0
      %p72 = por %p70, %p71
      %p73 = scmp.ne.s32.totalorder %s61, %s62
      %p74 = scmp.eq.s32.totalorder %s19, 3
      %p75 = por %p73, %p74
      %p77 = scmp.ne.s32.totalorder %s62, %s76
      %p78 = scmp.eq.s32.totalorder %s19, 0
      %p79 = por %p77, %p78
      %s81 = sadd.s32 %s80, 1
      %p84 = scmp.eq.s32.totalorder %s13, 3
      %p85 = scmp.ne.s32.totalorder %s80, %s82
      %p86 = scmp.eq.s32.totalorder %s13, 0
      %p87 = por %p85, %p86
      %p88 = scmp.ne.s32.totalorder %s80, %s82
      %p89 = scmp.eq.s32.totalorder %s18, 3
      %p90 = por %p88, %p89
      %p91 = scmp.ne.s32.totalorder %s82, %s83
      %p92 = scmp.eq.s32.totalorder %s18, 0
      %p93 = por %p91, %p92
      %p94 = scmp.ne.s32.totalorder %s82, %s83
      %p95 = scmp.eq.s32.totalorder %s19, 3
      %p96 = por %p94, %p95
      %p98 = scmp.ne.s32.totalorder %s83, %s97
      %p99 = scmp.eq.s32.totalorder %s19, 0
      %p100 = por %p98, %p99
      %s101 = ssub.s32 %s20, %s32
      %s102 = ssub.s32 %s21, %s28
      %s103 = sor.u32 %s101, %s102
      %p104 = scmp.eq.s32.totalorder %s103, 0
      %s106 = sadd.s32 %s105, 1
      %s107 = scalar_select %p104, %s105, %s106
      %p110 = pneg %p104
      %p111 = scmp.eq.s32.totalorder %s13, 3
      %p112 = por %p110, %p111
      %p113 = scmp.ne.s32.totalorder %s105, %s108
      %p114 = scmp.eq.s32.totalorder %s13, 0
      %p115 = por %p113, %p114
      %p116 = scmp.ne.s32.totalorder %s105, %s108
      %p117 = scmp.eq.s32.totalorder %s18, 3
      %p118 = por %p116, %p117
      %p119 = scmp.ne.s32.totalorder %s108, %s109
      %p120 = scmp.eq.s32.totalorder %s18, 0
      %p121 = por %p119, %p120
      %p122 = scmp.ne.s32.totalorder %s108, %s109
      %p123 = scmp.eq.s32.totalorder %s19, 3
      %p124 = por %p122, %p123
      %p126 = scmp.ne.s32.totalorder %s109, %s125
      %p127 = scmp.eq.s32.totalorder %s19, 0
      %p128 = por %p126, %p127
      %p129 = scmp.le.s32.totalorder 1, %s13
      %p130 = scmp.lt.s32.totalorder %s13, 5
      %p131 = pnand %p129, %p130
      %p132 = pneg %p131
      // Predicated region
      $region9: #{tpu_custom_call.1} parent=5 // pred_check
        _
      $region10: #{tpu_custom_call.1} parent=5 // pred_check_branch
        %134 = sbr.rel (%p131) target = $region12
      $region11: #{tpu_custom_call.1} parent=5 // pred_region
        %s135 = ssub.s32 %s13, 1
        // Predicated region
        $region13: #{tpu_custom_call.1} parent=11 // pred_check
          %p136 = pneg %p72
        $region14: #{tpu_custom_call.1} parent=11 // pred_check_branch
          %138 = sbr.rel (%p136) target = $region16
        $region15: #{tpu_custom_call.1} parent=11 // pred_region
          %s140 = ssub.s32 6144, 6144
          %141 = vsyncadd [#allocation3], %s140
          %s142 = sshll.u32 [#allocation2], 4
          %s143 = int_to_ptr.vmem [resolvable:$true] %s142
          %148 = dma.hbm_to_vmem [thread:$0]  %s1, 6144, %s143, [#allocation3], 256, 256, 16
        $region16: #{tpu_custom_call.1} parent=11 // pred_fallthru
          _
        // Predicated region
        $region17: #{tpu_custom_call.1} parent=11 // pred_check
          %p149 = pneg %p93
        $region18: #{tpu_custom_call.1} parent=11 // pred_check_branch
          %151 = sbr.rel (%p149) target = $region20
        $region19: #{tpu_custom_call.1} parent=11 // pred_region
          _
        $region20: #{tpu_custom_call.1} parent=11 // pred_fallthru
          _
      $region12: #{tpu_custom_call.1} parent=5 // pred_fallthru
        _
      %p152 = scmp.lt.s32.totalorder %s13, 4
      // Predicated region
      $region21: #{tpu_custom_call.1} parent=5 // pred_check
        %p153 = pneg %p152
      $region22: #{tpu_custom_call.1} parent=5 // pred_check_branch
        %155 = sbr.rel (%p153) target = $region24
      $region23: #{tpu_custom_call.1} parent=5 // pred_region
        // Predicated region
        $region25: #{tpu_custom_call.1} parent=23 // pred_check
          %p156 = pneg %p45
        $region26: #{tpu_custom_call.1} parent=23 // pred_check_branch
          %158 = sbr.rel (%p156) target = $region28
        $region27: #{tpu_custom_call.1} parent=23 // pred_region
          %p159 = scmp.lt.s32.totalorder %s20, 1
          %s160 = scalar_select %p159, %s20, 1
          %s161 = smul.addr %s160, 3
          %s162 = smul.addr %s161, 8
          %s163 = scalar_lea.vmem %s0, %s162
        $region28: #{tpu_custom_call.1} parent=23 // pred_fallthru
          _
      $region24: #{tpu_custom_call.1} parent=5 // pred_fallthru
        _
      %p164 = scmp.le.s32.totalorder 1, %s13
      %p165 = scmp.lt.s32.totalorder %s13, 5
      %p166 = pnand %p164, %p165
      %p167 = pneg %p166
      // Predicated region
      $region29: #{tpu_custom_call.1} parent=5 // pred_check
        _
      $region30: #{tpu_custom_call.1} parent=5 // pred_check_branch
        %169 = sbr.rel (%p166) target = $region32
      $region31: #{tpu_custom_call.1} parent=5 // pred_region
        %s170 = ssub.s32 %s13, 1
        // Predicated region
        $region33: #{tpu_custom_call.1} parent=31 // pred_check
          %p171 = pneg %p72
        $region34: #{tpu_custom_call.1} parent=31 // pred_check_branch
          %173 = sbr.rel (%p171) target = $region36
        $region35: #{tpu_custom_call.1} parent=31 // pred_region
          %174 = dma.done [#allocation3], 6144
        $region36: #{tpu_custom_call.1} parent=31 // pred_fallthru
          _
        %p175 = scmp.lt.s32.totalorder %s22, 1
        %s176 = scalar_select %p175, %s22, 1
        %s177 = smul.addr %s176, 3
        %s178 = smul.addr %s177, 8
        %s179 = scalar_lea.vmem %s0, %s178
        %p180 = pneg %p51
        %p181 = pneg %p48
        %p182 = pneg %p72
        %p183 = pneg %p69
        %p184 = pneg %p93
        %p185 = pneg %p90
        %p186 = pneg %p121
        %p187 = pneg %p118
        %s188 = sand.u32 %s108, 1
        %s189 = scalar_lea.sflag [#allocation4], %s188
        %s190 = sand.u32 %s108, 1
        %s191 = smul.addr %s190, 16
        %s192 = scalar_lea.vmem [#allocation5], %s191
        %p193 = scmp.lt.s32.totalorder %s22, 1
        %s194 = scalar_select %p193, %s22, 1
        %s195 = smul.addr %s194, 3
        %s196 = smul.addr %s195, 8
        %s197 = scalar_lea.vmem %s0, %s196
        %s198 = smul.u32 %s23, 8
        %s199 = scalar_lea.vmem %s197, %s198
        %v200 = vld [vmem:[%s199] sm:$0xff]
        %v201 = vld [vmem:[#allocation2] sm:$0xff]
        %v202 = vld [vmem:[#allocation2 + $0x8] sm:$0xff]
        %v203 = vld [vmem:[#allocation2 + $0x10] sm:$0xff]
        %v204 = vld [vmem:[#allocation2 + $0x18] sm:$0xff]
        %v205 = vld [vmem:[#allocation2 + $0x20] sm:$0xff]
        %v206 = vld [vmem:[#allocation2 + $0x28] sm:$0xff]
        %v207 = vld [vmem:[#allocation2 + $0x30] sm:$0xff]
        %v208 = vld [vmem:[#allocation2 + $0x38] sm:$0xff]
        %v209 = vld [vmem:[#allocation2 + $0x40] sm:$0xff]
        %v210 = vld [vmem:[#allocation2 + $0x48] sm:$0xff]
        %v211 = vld [vmem:[#allocation2 + $0x50] sm:$0xff]
        %v212 = vld [vmem:[#allocation2 + $0x58] sm:$0xff]
        %v213 = vld [vmem:[#allocation2 + $0x60] sm:$0xff]
        %v214 = vld [vmem:[#allocation2 + $0x68] sm:$0xff]
        %v215 = vld [vmem:[#allocation2 + $0x70] sm:$0xff]
        %v216 = vld [vmem:[#allocation2 + $0x78] sm:$0xff]
        %s217 = sadd.s32 %s198, 1
        %s218 = scalar_lea.vmem %s197, %s217
        %v219 = vld [vmem:[%s218] sm:$0xff]
        %s220 = scalar_lea.vmem [#allocation2], 128
        %v221 = vld [vmem:[%s220] sm:$0xff]
        %v222 = vld [vmem:[%s220 + $0x8] sm:$0xff]
        %v223 = vld [vmem:[%s220 + $0x10] sm:$0xff]
        %v224 = vld [vmem:[%s220 + $0x18] sm:$0xff]
        %v225 = vld [vmem:[%s220 + $0x20] sm:$0xff]
        %v226 = vld [vmem:[%s220 + $0x28] sm:$0xff]
        %v227 = vld [vmem:[%s220 + $0x30] sm:$0xff]
        %v228 = vld [vmem:[%s220 + $0x38] sm:$0xff]
        %v229 = vld [vmem:[%s220 + $0x40] sm:$0xff]
        %v230 = vld [vmem:[%s220 + $0x48] sm:$0xff]
        %v231 = vld [vmem:[%s220 + $0x50] sm:$0xff]
        %v232 = vld [vmem:[%s220 + $0x58] sm:$0xff]
        %v233 = vld [vmem:[%s220 + $0x60] sm:$0xff]
        %v234 = vld [vmem:[%s220 + $0x68] sm:$0xff]
        %v235 = vld [vmem:[%s220 + $0x70] sm:$0xff]
        %v236 = vld [vmem:[%s220 + $0x78] sm:$0xff]
        %vm237 = vcmask 523264
        %v239 = vsel %vm237, %v219, 0
        %241 = vmatprep.subr.mxu0 0.0
        %242 = vmatpush1.msra.mxu0 0.0
        %243 = vmatprep.subr.mxu0 0.0
        %244 = vmatpush1.msra.mxu0 0.0
        %245 = vmatprep.subr.mxu0 0.0
        %246 = vmatpush1.msra.mxu0 0.0
        %247 = vmatprep.subr.mxu0 0.0
        %248 = vmatpush1.msra.mxu0 0.0
        %249 = vmatprep.subr.mxu0 0.0
        %250 = vmatpush1.msra.mxu0 0.0
        %251 = vmatprep.subr.mxu0 0.0
        %252 = vmatpush1.msra.mxu0 0.0
        %253 = vmatprep.subr.mxu0 0.0
        %254 = vmatpush1.msra.mxu0 0.0
        %255 = vmatprep.subr.mxu0 0.0
        %256 = vmatpush1.msra.mxu0 0.0
        %257 = vmatprep.subr.mxu0 %v236
        %258 = vmatpush1.msra.mxu0 %v235
        %259 = vmatprep.subr.mxu0 %v234
        %260 = vmatpush1.msra.mxu0 %v233
        %261 = vmatprep.subr.mxu0 %v232
        %262 = vmatpush1.msra.mxu0 %v231
        %263 = vmatprep.subr.mxu0 %v230
        %264 = vmatpush1.msra.mxu0 %v229
        %265 = vmatprep.subr.mxu0 %v228
        %266 = vmatpush1.msra.mxu0 %v227
        %267 = vmatprep.subr.mxu0 %v226
        %268 = vmatpush1.msra.mxu0 %v225
        %269 = vmatprep.subr.mxu0 %v224
        %270 = vmatpush1.msra.mxu0 %v223
        %271 = vmatprep.subr.mxu0 %v222
        %272 = vmatpush1.msra.mxu0 %v221
        %273 = vmatprep.subr.mxu0 0.0
        %274 = vmatpush2.msra.mxu0 0.0
        %275 = vmatprep.subr.mxu0 0.0
        %276 = vmatpush2.msra.mxu0 0.0
        %277 = vmatprep.subr.mxu0 0.0
        %278 = vmatpush2.msra.mxu0 0.0
        %279 = vmatprep.subr.mxu0 0.0
        %280 = vmatpush2.msra.mxu0 0.0
        %281 = vmatprep.subr.mxu0 0.0
        %282 = vmatpush2.msra.mxu0 0.0
        %283 = vmatprep.subr.mxu0 0.0
        %284 = vmatpush2.msra.mxu0 0.0
        %285 = vmatprep.subr.mxu0 0.0
        %286 = vmatpush2.msra.mxu0 0.0
        %287 = vmatprep.subr.mxu0 0.0
        %288 = vmatpush2.msra.mxu0 0.0
        %289 = vmatprep.subr.mxu0 0.0
        %290 = vmatpush2.msra.mxu0 0.0
        %291 = vmatprep.subr.mxu0 0.0
        %292 = vmatpush2.msra.mxu0 0.0
        %293 = vmatprep.subr.mxu0 0.0
        %294 = vmatpush2.msra.mxu0 0.0
        %295 = vmatprep.subr.mxu0 0.0
        %296 = vmatpush2.msra.mxu0 0.0
        %297 = vmatprep.subr.mxu0 0.0
        %298 = vmatpush2.msra.mxu0 0.0
        %299 = vmatprep.subr.mxu0 0.0
        %300 = vmatpush2.msra.mxu0 0.0
        %301 = vmatprep.subr.mxu0 0.0
        %302 = vmatpush2.msra.mxu0 0.0
        %303 = vmatprep.subr.mxu0 0.0
        %304 = vmatpush2.msra.mxu0 0.0
        %305 = vmatprep.mubr.f32.mxu0 0.0
        %306 = vmatmul.mubr.f32.gmra.mxu0 %v239
        %v307 = vpop.f32.mrf.mxu0
        %v308 = vadd.f32 0.0, %v307
        %v309 = vpop.f32.mrf.mxu0
        %v310 = vadd.f32 0.0, %v309
        %311 = vdwg.mxu0
        %v313 = vsel %vm237, %v200, 0
        %315 = vmatprep.subr.mxu0 0.0
        %316 = vmatpush1.msra.mxu0 0.0
        %317 = vmatprep.subr.mxu0 0.0
        %318 = vmatpush1.msra.mxu0 0.0
        %319 = vmatprep.subr.mxu0 0.0
        %320 = vmatpush1.msra.mxu0 0.0
        %321 = vmatprep.subr.mxu0 0.0
        %322 = vmatpush1.msra.mxu0 0.0
        %323 = vmatprep.subr.mxu0 0.0
        %324 = vmatpush1.msra.mxu0 0.0
        %325 = vmatprep.subr.mxu0 0.0
        %326 = vmatpush1.msra.mxu0 0.0
        %327 = vmatprep.subr.mxu0 0.0
        %328 = vmatpush1.msra.mxu0 0.0
        %329 = vmatprep.subr.mxu0 0.0
        %330 = vmatpush1.msra.mxu0 0.0
        %331 = vmatprep.subr.mxu0 %v216
        %332 = vmatpush1.msra.mxu0 %v215
        %333 = vmatprep.subr.mxu0 %v214
        %334 = vmatpush1.msra.mxu0 %v213
        %335 = vmatprep.subr.mxu0 %v212
        %336 = vmatpush1.msra.mxu0 %v211
        %337 = vmatprep.subr.mxu0 %v210
        %338 = vmatpush1.msra.mxu0 %v209
        %339 = vmatprep.subr.mxu0 %v208
        %340 = vmatpush1.msra.mxu0 %v207
        %341 = vmatprep.subr.mxu0 %v206
        %342 = vmatpush1.msra.mxu0 %v205
        %343 = vmatprep.subr.mxu0 %v204
        %344 = vmatpush1.msra.mxu0 %v203
        %345 = vmatprep.subr.mxu0 %v202
        %346 = vmatpush1.msra.mxu0 %v201
        %347 = vmatprep.subr.mxu0 0.0
        %348 = vmatpush2.msra.mxu0 0.0
        %349 = vmatprep.subr.mxu0 0.0
        %350 = vmatpush2.msra.mxu0 0.0
        %351 = vmatprep.subr.mxu0 0.0
        %352 = vmatpush2.msra.mxu0 0.0
        %353 = vmatprep.subr.mxu0 0.0
        %354 = vmatpush2.msra.mxu0 0.0
        %355 = vmatprep.subr.mxu0 0.0
        %356 = vmatpush2.msra.mxu0 0.0
        %357 = vmatprep.subr.mxu0 0.0
        %358 = vmatpush2.msra.mxu0 0.0
        %359 = vmatprep.subr.mxu0 0.0
        %360 = vmatpush2.msra.mxu0 0.0
        %361 = vmatprep.subr.mxu0 0.0
        %362 = vmatpush2.msra.mxu0 0.0
        %363 = vmatprep.subr.mxu0 0.0
        %364 = vmatpush2.msra.mxu0 0.0
        %365 = vmatprep.subr.mxu0 0.0
        %366 = vmatpush2.msra.mxu0 0.0
        %367 = vmatprep.subr.mxu0 0.0
        %368 = vmatpush2.msra.mxu0 0.0
        %369 = vmatprep.subr.mxu0 0.0
        %370 = vmatpush2.msra.mxu0 0.0
        %371 = vmatprep.subr.mxu0 0.0
        %372 = vmatpush2.msra.mxu0 0.0
        %373 = vmatprep.subr.mxu0 0.0
        %374 = vmatpush2.msra.mxu0 0.0
        %375 = vmatprep.subr.mxu0 0.0
        %376 = vmatpush2.msra.mxu0 0.0
        %377 = vmatprep.subr.mxu0 0.0
        %378 = vmatpush2.msra.mxu0 0.0
        %379 = vmatprep.mubr.f32.mxu0 0.0
        %380 = vmatmul.mubr.f32.gmra.mxu0 %v313
        %v381 = vpop.f32.mrf.mxu0
        %v382 = vadd.f32 %v308, %v381
        %v383 = vpop.f32.mrf.mxu0
        %v384 = vadd.f32 %v310, %v383
        %385 = vdwg.mxu0
        %s386 = sadd.s32 %s198, 2
        %s387 = scalar_lea.vmem %s197, %s386
        %v388 = vld [vmem:[%s387] sm:$0xff]
        %s389 = scalar_lea.vmem [#allocation2], 256
        %v390 = vld [vmem:[%s389] sm:$0xff]
        %v391 = vld [vmem:[%s389 + $0x8] sm:$0xff]
        %v392 = vld [vmem:[%s389 + $0x10] sm:$0xff]
        %v393 = vld [vmem:[%s389 + $0x18] sm:$0xff]
        %v394 = vld [vmem:[%s389 + $0x20] sm:$0xff]
        %v395 = vld [vmem:[%s389 + $0x28] sm:$0xff]
        %v396 = vld [vmem:[%s389 + $0x30] sm:$0xff]
        %v397 = vld [vmem:[%s389 + $0x38] sm:$0xff]
        %v398 = vld [vmem:[%s389 + $0x40] sm:$0xff]
        %v399 = vld [vmem:[%s389 + $0x48] sm:$0xff]
        %v400 = vld [vmem:[%s389 + $0x50] sm:$0xff]
        %v401 = vld [vmem:[%s389 + $0x58] sm:$0xff]
        %v402 = vld [vmem:[%s389 + $0x60] sm:$0xff]
        %v403 = vld [vmem:[%s389 + $0x68] sm:$0xff]
        %v404 = vld [vmem:[%s389 + $0x70] sm:$0xff]
        %v405 = vld [vmem:[%s389 + $0x78] sm:$0xff]
        %v407 = vsel %vm237, %v388, 0
        %409 = vmatprep.subr.mxu0 0.0
        %410 = vmatpush1.msra.mxu0 0.0
        %411 = vmatprep.subr.mxu0 0.0
        %412 = vmatpush1.msra.mxu0 0.0
        %413 = vmatprep.subr.mxu0 0.0
        %414 = vmatpush1.msra.mxu0 0.0
        %415 = vmatprep.subr.mxu0 0.0
        %416 = vmatpush1.msra.mxu0 0.0
        %417 = vmatprep.subr.mxu0 0.0
        %418 = vmatpush1.msra.mxu0 0.0
        %419 = vmatprep.subr.mxu0 0.0
        %420 = vmatpush1.msra.mxu0 0.0
        %421 = vmatprep.subr.mxu0 0.0
        %422 = vmatpush1.msra.mxu0 0.0
        %423 = vmatprep.subr.mxu0 0.0
        %424 = vmatpush1.msra.mxu0 0.0
        %425 = vmatprep.subr.mxu0 %v405
        %426 = vmatpush1.msra.mxu0 %v404
        %427 = vmatprep.subr.mxu0 %v403
        %428 = vmatpush1.msra.mxu0 %v402
        %429 = vmatprep.subr.mxu0 %v401
        %430 = vmatpush1.msra.mxu0 %v400
        %431 = vmatprep.subr.mxu0 %v399
        %432 = vmatpush1.msra.mxu0 %v398
        %433 = vmatprep.subr.mxu0 %v397
        %434 = vmatpush1.msra.mxu0 %v396
        %435 = vmatprep.subr.mxu0 %v395
        %436 = vmatpush1.msra.mxu0 %v394
        %437 = vmatprep.subr.mxu0 %v393
        %438 = vmatpush1.msra.mxu0 %v392
        %439 = vmatprep.subr.mxu0 %v391
        %440 = vmatpush1.msra.mxu0 %v390
        %441 = vmatprep.subr.mxu0 0.0
        %442 = vmatpush2.msra.mxu0 0.0
        %443 = vmatprep.subr.mxu0 0.0
        %444 = vmatpush2.msra.mxu0 0.0
        %445 = vmatprep.subr.mxu0 0.0
        %446 = vmatpush2.msra.mxu0 0.0
        %447 = vmatprep.subr.mxu0 0.0
        %448 = vmatpush2.msra.mxu0 0.0
        %449 = vmatprep.subr.mxu0 0.0
        %450 = vmatpush2.msra.mxu0 0.0
        %451 = vmatprep.subr.mxu0 0.0
        %452 = vmatpush2.msra.mxu0 0.0
        %453 = vmatprep.subr.mxu0 0.0
        %454 = vmatpush2.msra.mxu0 0.0
        %455 = vmatprep.subr.mxu0 0.0
        %456 = vmatpush2.msra.mxu0 0.0
        %457 = vmatprep.subr.mxu0 0.0
        %458 = vmatpush2.msra.mxu0 0.0
        %459 = vmatprep.subr.mxu0 0.0
        %460 = vmatpush2.msra.mxu0 0.0
        %461 = vmatprep.subr.mxu0 0.0
        %462 = vmatpush2.msra.mxu0 0.0
        %463 = vmatprep.subr.mxu0 0.0
        %464 = vmatpush2.msra.mxu0 0.0
        %465 = vmatprep.subr.mxu0 0.0
        %466 = vmatpush2.msra.mxu0 0.0
        %467 = vmatprep.subr.mxu0 0.0
        %468 = vmatpush2.msra.mxu0 0.0
        %469 = vmatprep.subr.mxu0 0.0
        %470 = vmatpush2.msra.mxu0 0.0
        %471 = vmatprep.subr.mxu0 0.0
        %472 = vmatpush2.msra.mxu0 0.0
        %473 = vmatprep.mubr.f32.mxu0 0.0
        %474 = vmatmul.mubr.f32.gmra.mxu0 %v407
        %v475 = vpop.f32.mrf.mxu0
        %v476 = vadd.f32 0.0, %v475
        %v477 = vpop.f32.mrf.mxu0
        %v478 = vadd.f32 0.0, %v477
        %479 = vdwg.mxu0
        %v480 = vadd.f32 %v382, %v476
        %v481 = vadd.f32 %v384, %v478
        %v482 = vld [vmem:[%s2] sm:$0x3]
        %v484 = vlaneseq
        %v485 = vshrl.u32 %v484, 7
        %v486 = vsub.s32 0, %v485
        %v487 = vrot.slane %v482, %v486
        %v488 = vlaneseq
        %v489 = vshrl.u32 %v488, 7
        %v490 = vsub.s32 1, %v489
        %v491 = vrot.slane %v482, %v490
        %v494 = vadd.f32 %v480, %v487
        %v495 = vadd.f32 %v481, %v491
        %496 = vst [vmem:[%s192] sm:$0xff] %v494
        %497 = vst [vmem:[%s192 + $0x8] sm:$0xff] %v495
        %s498 = sand.u32 %s108, 1
        %s499 = scalar_lea.sflag [#allocation4], %s498
        %s500 = sand.u32 %s108, 1
        %s501 = smul.addr %s500, 16
        %s502 = scalar_lea.vmem [#allocation5], %s501
        // Predicated region
        $region37: #{tpu_custom_call.1} parent=31 // pred_check
          %p503 = pneg %p118
        $region38: #{tpu_custom_call.1} parent=31 // pred_check_branch
          %505 = sbr.rel (%p503) target = $region40
        $region39: #{tpu_custom_call.1} parent=31 // pred_region
          %s507 = ssub.s32 256, 256
          %508 = vsyncadd %s499, %s507
          %s509 = smul.addr %s23, 2
          %s510 = smul.addr %s22, 4
          %s511 = sadd.s32 %s509, %s510
          %s512 = smul.addr %s511, 128
          %s513 = scalar_lea.hbm %s3, %s512
          %s515 = sshll.u32 %s502, 4
          %s516 = int_to_ptr.vmem [resolvable:$true] %s515
          %518 = dma.vmem_to_hbm [thread:$0]  %s516, 256, %s513, %s499
        $region40: #{tpu_custom_call.1} parent=31 // pred_fallthru
          _
      $region32: #{tpu_custom_call.1} parent=5 // pred_fallthru
        _
      %p519 = scmp.le.s32.totalorder 2, %s13
      // Predicated region
      $region41: #{tpu_custom_call.1} parent=5 // pred_check
        %p520 = pneg %p519
      $region42: #{tpu_custom_call.1} parent=5 // pred_check_branch
        %522 = sbr.rel (%p520) target = $region44
      $region43: #{tpu_custom_call.1} parent=5 // pred_region
        %s523 = ssub.s32 %s13, 2
        // Predicated region
        $region45: #{tpu_custom_call.1} parent=43 // pred_check
          %p524 = pneg %p124
        $region46: #{tpu_custom_call.1} parent=43 // pred_check_branch
          %526 = sbr.rel (%p524) target = $region48
        $region47: #{tpu_custom_call.1} parent=43 // pred_region
          %s527 = sand.u32 %s109, 1
          %s528 = scalar_lea.sflag [#allocation4], %s527
          %s529 = sand.u32 %s109, 1
          %s530 = smul.addr %s529, 16
          %s531 = scalar_lea.vmem [#allocation5], %s530
          %532 = dma.done %s528, 256
        $region48: #{tpu_custom_call.1} parent=43 // pred_fallthru
          _
      $region44: #{tpu_custom_call.1} parent=5 // pred_fallthru
        _
    $region6: #{tpu_custom_call.1} parent=1 // loop_footer
      %s17 = sadd.s32 1, %s13
    $region7: #{tpu_custom_call.1} parent=1 // loop_footer_branch
      %12 = sbr.rel target = $region3
    $region8: #{tpu_custom_call.1} parent=1 // loop_exit
      _
    %533 = vsyncpa [#allocation3], 1
    %s534 = scalar_lea.sflag [#allocation3], 1
    %535 = vsyncpa %s534, 1
    %536 = vsyncpa [#allocation4], 1
    %s537 = scalar_lea.sflag [#allocation4], 1
    %538 = vsyncpa %s537, 1

</llo_original>
